<compile_context>
chip_gen: v5e
topology: v5e:2x2
jax: 0.10.0
libtpu: 0.0.40
codegen_flags: <defaults>
</compile_context>

<pallas_src>
import functools

import numpy as np

import jax
import jax.numpy as jnp
from jax.experimental import pallas as pl
from jax.experimental.pallas import tpu as pltpu

LANES = 128
SINGLE_BLOCK_MAX_ROWS = 4096   # whole-pred single-step kernel up to 2 MiB f32
MULTI_BLOCK_ROWS = 2048        # 1 MiB f32 blocks: >=85% HBM roofline, VMEM-safe


# --------------------------------------------------------------------------
# Elementwise loss functions (per GAN type): GANLoss == weight * mean(f(pred)).
# --------------------------------------------------------------------------
def _softplus(x):
    # numerically stable softplus: max(x, 0) + log1p(exp(-|x|))
    return jnp.maximum(x, 0.0) + jnp.log1p(jnp.exp(-jnp.abs(x)))


def _make_elem_fn(gan_type, target_val, target_is_real, is_disc):
    """Returns f such that GANLoss == mean(f(pred)) (loss_weight applied outside)."""
    if gan_type == 'vanilla':
        t = float(target_val)
        return lambda x: _softplus(x) - t * x          # BCEWithLogitsLoss
    elif gan_type == 'lsgan':
        t = float(target_val)
        return lambda x: (x - t) * (x - t)             # MSELoss
    elif gan_type == 'wgan':
        sign = -1.0 if target_is_real else 1.0
        return lambda x: sign * x
    elif gan_type == 'wgan_softplus':
        if target_is_real:
            return lambda x: _softplus(-x)
        return lambda x: _softplus(x)
    elif gan_type == 'hinge':
        if is_disc:
            sign = -1.0 if target_is_real else 1.0
            return lambda x: jnp.maximum(1.0 + sign * x, 0.0)
        return lambda x: -x                            # generator: -mean(x)
    else:
        raise NotImplementedError(f'GAN type {gan_type} is not implemented.')


def _elem_fn_at_zero(gan_type, target_val, target_is_real, is_disc):
    """f32 value of elem_fn(0.0); used to correct for zero lane-padding."""
    ln2 = float(np.log1p(np.exp(np.float32(0.0))))     # matches kernel f32 path
    if gan_type == 'vanilla':
        return ln2                                     # softplus(0) - t*0
    if gan_type == 'lsgan':
        t = np.float32(target_val)
        return float(t * t)
    if gan_type == 'wgan':
        return 0.0
    if gan_type == 'wgan_softplus':
        return ln2
    if gan_type == 'hinge':
        return 1.0 if is_disc else 0.0                 # max(1+0,0) / -0
    raise NotImplementedError(gan_type)


# --------------------------------------------------------------------------
# Pallas kernel: per-block (out_sub, 128) partial sums of factor * elem_fn(x).
# --------------------------------------------------------------------------
def _partial_sum_kernel(x_ref, o_ref, *, elem_fn, factor, out_sub, tail_rows):
    vals = elem_fn(x_ref[...].astype(jnp.float32))        # (block_rows, LANES) f32

    def reduce_store(v):
        if out_sub == 8:
            # Fold sublane-groups together: pure vreg-wise VPU adds, no XLU.
            s = jnp.sum(v.reshape(-1, 8, LANES), axis=0)
        else:
            # Tiny single-block path (rows not a multiple of 8).
            s = jnp.sum(v, axis=0, keepdims=True)
        o_ref[...] = (s * factor).reshape(1, out_sub, LANES)

    if tail_rows is None:
        # Every block covers only valid rows: no masking anywhere.
        reduce_store(vals)
    else:
        # Large pred whose row count doesn't divide by block_rows: only the
        # LAST block contains out-of-bounds (garbage) rows and pays the mask.
        is_last = pl.program_id(0) == pl.num_programs(0) - 1

        @pl.when(jnp.logical_not(is_last))
        def _():
            reduce_store(vals)

        @pl.when(is_last)
        def _():
            row = jax.lax.broadcasted_iota(jnp.int32, vals.shape, 0)
            reduce_store(jnp.where(row < tail_rows, vals, 0.0))


# --------------------------------------------------------------------------
# Per-scale wrapper: weight * mean(elem_fn(pred)) with one pallas_call.
# --------------------------------------------------------------------------
def _scale_loss(pred, weight, elem_fn, elem0):
    n = int(pred.size)
    if n == 0:
        # torch .mean() over an empty tensor is NaN; mirror that, don't crash.
        return jnp.float32(float('nan'))

    if pred.dtype.name not in ('float32', 'bfloat16'):
        # TODO(synk): stream fp16 / integer dtypes natively once verified.
        pred = pred.astype(jnp.float32)

    flat = jnp.ravel(pred)                               # free reshape
    pad = (-n) % LANES
    if pad:
        flat = jnp.pad(flat, (0, pad))                   # only misaligned preds copy
    rows = (n + pad) // LANES
    factor = float(weight) / float(n)                    # folded into the kernel

    if rows <= SINGLE_BLOCK_MAX_ROWS:
        block_rows, tail_rows = rows, None                # 1 DMA + 1 body
    else:
        block_rows = MULTI_BLOCK_ROWS
        rem = rows % block_rows
        tail_rows = rem if rem else None
    nblocks = pl.cdiv(rows, block_rows)
    out_sub = 8 if block_rows % 8 == 0 else 1

    x2d = flat.reshape(rows, LANES)                       # free reshape
    kernel = functools.partial(_partial_sum_kernel, elem_fn=elem_fn,
                               factor=factor, out_sub=out_sub,
                               tail_rows=tail_rows)
    partials = pl.pallas_call(
        kernel,
        out_shape=jax.ShapeDtypeStruct((nblocks, out_sub, LANES), jnp.float32),
        grid_spec=pl.GridSpec(
            grid=(nblocks,),
            in_specs=[pl.BlockSpec((block_rows, LANES), lambda b: (b, 0))],
            out_specs=pl.BlockSpec((1, out_sub, LANES), lambda b: (b, 0, 0))),
        compiler_params=pltpu.CompilerParams(
            dimension_semantics=("parallel",)),           # 2-TC sharding on v7x
    )(x2d)

    loss = jnp.sum(partials)                              # tiny epilogue reduce
    if pad:
        # Lane padding is zeros; remove its trace-time-constant contribution.
        loss = loss - jnp.float32(pad * elem0 * factor)
    return loss


# --------------------------------------------------------------------------
# GANLoss / MultiScaleGANLoss wrappers (parameter / control-flow glue).
# --------------------------------------------------------------------------
class GANLossPallas:
    def __init__(self, gan_type, real_label_val=1.0, fake_label_val=0.0,
                 loss_weight=1.0):
        self.gan_type = gan_type
        self.real_label_val = real_label_val
        self.fake_label_val = fake_label_val
        self.loss_weight = loss_weight

    def _weighted_loss(self, preds, weights, target_is_real, is_disc):
        target_val = (self.real_label_val if target_is_real
                      else self.fake_label_val)
        elem_fn = _make_elem_fn(self.gan_type, target_val, target_is_real,
                                is_disc)
        elem0 = _elem_fn_at_zero(self.gan_type, target_val, target_is_real,
                                 is_disc)
        total = jnp.float32(0.0)
        for p, w in zip(preds, weights):
            total = total + _scale_loss(p, w, elem_fn, elem0)
        return total

    def __call__(self, inp, target_is_real, is_disc=False):
        # loss_weight only applies to the generator path (is_disc=False).
        weight = 1.0 if is_disc else self.loss_weight
        return self._weighted_loss([inp], [weight], target_is_real, is_disc)


class MultiScaleGANLossPallas(GANLossPallas):
    def __call__(self, inp, target_is_real, is_disc=False):
        if isinstance(inp, list):
            preds = [p[-1] if isinstance(p, list) else p for p in inp]
            w = (1.0 if is_disc else self.loss_weight) / len(inp)
            return self._weighted_loss(preds, [w] * len(preds),
                                       target_is_real, is_disc)
        return super().__call__(inp, target_is_real, is_disc)


# --------------------------------------------------------------------------
# Pure-JAX reference (for correctness check).
# --------------------------------------------------------------------------
def _ref_gan_loss(x, gan_type, target_is_real, is_disc, real_val, fake_val,
                  loss_weight):
    x = x.astype(jnp.float32)
    if gan_type == 'vanilla':
        t = real_val if target_is_real else fake_val
        loss = jnp.mean(jnp.maximum(x, 0.0) + jnp.log1p(jnp.exp(-jnp.abs(x)))
                        - t * x)
    elif gan_type == 'lsgan':
        t = real_val if target_is_real else fake_val
        loss = jnp.mean((x - t) ** 2)
    elif gan_type == 'wgan':
        loss = -jnp.mean(x) if target_is_real else jnp.mean(x)
    elif gan_type == 'wgan_softplus':
        loss = (jnp.mean(jax.nn.softplus(-x)) if target_is_real
                else jnp.mean(jax.nn.softplus(x)))
    elif gan_type == 'hinge':
        if is_disc:
            xi = -x if target_is_real else x
            loss = jnp.mean(jax.nn.relu(1.0 + xi))
        else:
            loss = -jnp.mean(x)
    else:
        raise NotImplementedError
    return loss if is_disc else loss * loss_weight


def _ref_multiscale(preds, gan_type, target_is_real, is_disc, real_val,
                    fake_val, loss_weight):
    loss = 0.0
    for p in preds:
        if isinstance(p, list):
            p = p[-1]
        loss = loss + _ref_gan_loss(p, gan_type, target_is_real, is_disc,
                                    real_val, fake_val, loss_weight)
    return loss / len(preds)


# --------------------------------------------------------------------------
if __name__ == "__main__":
    key = jax.random.PRNGKey(0)
    k1, k2, k3, k4, k5, k6 = jax.random.split(key, 6)

    ok = True

    # --- Multi-scale discriminator predictions (NCHW); first scale is a
    #     nested list (MultiScaleGANLoss takes the last element). -------------
    p0 = jax.random.normal(k1, (2, 1, 16, 16), dtype=jnp.float32)
    p1 = jax.random.normal(k2, (2, 1, 8, 8), dtype=jnp.float32)
    p2 = jax.random.normal(k3, (2, 1, 4, 4), dtype=jnp.float32)
    preds = [[p0 * 0.5, p0], p1, p2]

    for gan_type in ['vanilla', 'lsgan', 'wgan', 'wgan_softplus', 'hinge']:
        loss_mod = MultiScaleGANLossPallas(gan_type, real_label_val=1.0,
                                           fake_label_val=0.0, loss_weight=2.0)
        for target_is_real in (True, False):
            for is_disc in (True, False):
                out = jax.block_until_ready(
                    loss_mod(preds, target_is_real, is_disc))
                ref = jax.block_until_ready(
                    _ref_multiscale(preds, gan_type, target_is_real, is_disc,
                                    1.0, 0.0, 2.0))
                if not jnp.allclose(out, ref, rtol=1e-5, atol=1e-5):
                    ok = False
                    print(f"MISMATCH multi {gan_type} real={target_is_real} "
                          f"disc={is_disc}: {out} vs {ref}")

    # --- Single tensor, non-128-aligned numel (exercises pad + constant fix).
    x_odd = jax.random.normal(k4, (2, 3, 7, 5), dtype=jnp.float32)
    single_mod = GANLossPallas('vanilla', loss_weight=0.5)
    for target_is_real in (True, False):
        for is_disc in (True, False):
            out = jax.block_until_ready(
                single_mod(x_odd, target_is_real, is_disc))
            ref = jax.block_until_ready(
                _ref_gan_loss(x_odd, 'vanilla', target_is_real, is_disc,
                              1.0, 0.0, 0.5))
            if not jnp.allclose(out, ref, rtol=1e-5, atol=1e-5):
                ok = False
                print(f"MISMATCH single vanilla real={target_is_real} "
                      f"disc={is_disc}: {out} vs {ref}")

    # --- bf16 input (streamed as bf16, reduced in f32 inside the kernel). ----
    x_bf16 = (p0 * 0.75).astype(jnp.bfloat16)
    bf16_mod = GANLossPallas('lsgan', loss_weight=1.0)
    out = jax.block_until_ready(bf16_mod(x_bf16, True, False))
    ref = jax.block_until_ready(
        _ref_gan_loss(x_bf16.astype(jnp.float32), 'lsgan', True, False,
                      1.0, 0.0, 1.0))
    if not jnp.allclose(out, ref, rtol=1e-5, atol=1e-5):
        ok = False
        print(f"MISMATCH bf16 lsgan: {out} vs {ref}")

    # --- Large, 128-aligned pred: zero-copy multi-block path + row-masked tail.
    x_big = jax.random.normal(k5, (1, 1, 640, 1000), dtype=jnp.float32)
    for gan_type, tr, dc, lw in (('lsgan', True, True, 1.0),
                                 ('vanilla', False, False, 2.0)):
        mod = GANLossPallas(gan_type, loss_weight=lw)
        out = jax.block_until_ready(mod(x_big, tr, dc))
        ref = jax.block_until_ready(
            _ref_gan_loss(x_big, gan_type, tr, dc, 1.0, 0.0, lw))
        if not jnp.allclose(out, ref, rtol=1e-4, atol=1e-5):
            ok = False
            print(f"MISMATCH big {gan_type} real={tr} disc={dc}: {out} vs {ref}")

    # --- Large, misaligned pred: pad fix + multi-block + row-masked tail. ----
    x_big_odd = jax.random.normal(k6, (1, 1, 633, 997), dtype=jnp.float32)
    mod = GANLossPallas('vanilla', loss_weight=0.5)
    out = jax.block_until_ready(mod(x_big_odd, True, False))
    ref = jax.block_until_ready(
        _ref_gan_loss(x_big_odd, 'vanilla', True, False, 1.0, 0.0, 0.5))
    if not jnp.allclose(out, ref, rtol=1e-4, atol=1e-5):
        ok = False
        print(f"MISMATCH big-odd vanilla: {out} vs {ref}")

    if ok:
        print("KERNEL_OK")
</pallas_src>

<mosaic_0001>
module attributes {stable_mosaic.version = 11 : i64} {
  func.func @_partial_sum_kernel(%arg0: i32, %arg1: memref<4x128xf32, #tpu.memory_space<vmem>>, %arg2: memref<1x1x128xf32, #tpu.memory_space<vmem>>) attributes {dimension_semantics = [#tpu.dimension_semantics<parallel>], iteration_bounds = array<i64: 1>, scalar_prefetch = 0 : i64, scratch_operands = 0 : i64, tpu.core_type = #tpu.core_type<tc>, window_params = [{transform_indices = @transform_0, window_bounds = array<i64: 4, 128>}, {transform_indices = @transform_1, window_bounds = array<i64: 1, 1, 128>}]} {
    %c0 = arith.constant 0 : index
    %c0_0 = arith.constant 0 : index
    %0 = vector.load %arg1[%c0, %c0_0] : memref<4x128xf32, #tpu.memory_space<vmem>>, vector<4x128xf32>
    %cst = arith.constant 0.000000e+00 : f32
    %1 = vector.broadcast %cst : f32 to vector<4x128xf32>
    %2 = arith.maximumf %0, %1 : vector<4x128xf32>
    %3 = math.absf %0 : vector<4x128xf32>
    %cst_1 = arith.constant 0.000000e+00 : f32
    %4 = vector.broadcast %cst_1 : f32 to vector<4x128xf32>
    %5 = arith.subf %4, %3 : vector<4x128xf32>
    %6 = math.exp %5 : vector<4x128xf32>
    %7 = math.log1p %6 : vector<4x128xf32>
    %8 = arith.addf %2, %7 : vector<4x128xf32>
    %cst_2 = arith.constant 1.000000e+00 : f32
    %9 = vector.broadcast %cst_2 : f32 to vector<4x128xf32>
    %10 = arith.mulf %9, %0 : vector<4x128xf32>
    %11 = arith.subf %8, %10 : vector<4x128xf32>
    %cst_3 = arith.constant dense<0.000000e+00> : vector<128xf32>
    %12 = vector.multi_reduction <add>, %11, %cst_3 [0] : vector<4x128xf32> to vector<128xf32>
    %13 = vector.shape_cast %12 : vector<128xf32> to vector<1x128xf32>
    %cst_4 = arith.constant 6.51041686E-4 : f32
    %14 = vector.broadcast %cst_4 : f32 to vector<1x128xf32>
    %15 = arith.mulf %13, %14 : vector<1x128xf32>
    %16 = vector.shape_cast %15 : vector<1x128xf32> to vector<1x1x128xf32>
    %c0_5 = arith.constant 0 : index
    %c0_6 = arith.constant 0 : index
    %c0_7 = arith.constant 0 : index
    %17 = vector.load %arg2[%c0_5, %c0_6, %c0_7] : memref<1x1x128xf32, #tpu.memory_space<vmem>>, vector<1x1x128xf32>
    tpu.vector_store %arg2[%c0_5, %c0_6, %c0_7], %16 {strides = array<i32>} : memref<1x1x128xf32, #tpu.memory_space<vmem>>, vector<1x1x128xf32>,
    return
  }
  func.func @transform_0(%arg0: i32) -> (i32, i32) {
    %c0_i32 = arith.constant 0 : i32
    %c0_i32_0 = arith.constant 0 : i32
    return %arg0, %c0_i32 : i32, i32
  }
  func.func @transform_1(%arg0: i32) -> (i32, i32, i32) {
    %c0_i32 = arith.constant 0 : i32
    %c0_i32_0 = arith.constant 0 : i32
    %c0_i32_1 = arith.constant 0 : i32
    return %arg0, %c0_i32, %c0_i32_0 : i32, i32, i32
  }
}

</mosaic_0001>

<llo_original>
// kernel: tpu_custom_call.1
$region0: #{tpu_custom_call.1}
  #allocation0 [shape = 'u32[]', space=smem, size = 0x4, offset = 0x4, fixed_abs, tag = 'smem constant byte address 0x4 - core index']
  #allocation1 [shape = 'u32[72,128]{1,0:T(1,128)}', space=vmem, size = 0x9000, scoped, tag = 'internal scratch']
  %s0 = inlined_call_operand.hbm [shape: f32[4,128], index: 0, kind: input, shape index: {}]
  %s1 = inlined_call_operand.hbm [shape: f32[1,1,128], index: 1, kind: output, shape index: {}]
  %s2 = sld [smem:[#allocation0]]
  $region18: #{tpu_custom_call.1} parent=0
    _
  %s4 = ssub.s32 1, %s2
  %s5 = scalar_select 0, %s4, %s2
  $region1: #{tpu_custom_call.1} parent=0
    #allocation2 [shape = 'u8[2048]{0}', space=vmem, size = 0x800, scoped, tag = 'input window, operand 0, single buffered']
    #allocation3 [shape = 's32[1]{0}', space=sflag, size = 0x4, scoped, tag = 'scoped memory for tpu_custom_call.1']
    #allocation4 [shape = 's32[1]{0}', space=sflag, size = 0x4, scoped, tag = 'scoped memory for tpu_custom_call.1']
    #allocation5 [shape = 'u8[512]{0}', space=vmem, size = 0x400, scoped, tag = 'output window, operand 0, single buffered']
    %6 = vsyncpa [#allocation3], 0
    %7 = vsyncpa [#allocation4], 0
    // Predicated region
    $region2: #{tpu_custom_call.1} parent=1 // pred_check
      _
    $region3: #{tpu_custom_call.1} parent=1 // pred_check_branch
      %9 = sbr.rel (0) target = $region5
    $region4: #{tpu_custom_call.1} parent=1 // pred_region
      %11 = vsyncadd [#allocation3], 0
      %s13 = sshll.u32 %s0, 4
      %s14 = int_to_ptr.hbm [resolvable:$true] %s13
      %s15 = sshll.u32 [#allocation2], 4
      %s16 = int_to_ptr.vmem [resolvable:$true] %s15
      %18 = dma.hbm_to_vmem [thread:$0]  %s14, 64, %s16, [#allocation3]
    $region5: #{tpu_custom_call.1} parent=1 // pred_fallthru
      _
    // Predicated region
    $region6: #{tpu_custom_call.1} parent=1 // pred_check
      _
    $region7: #{tpu_custom_call.1} parent=1 // pred_check_branch
      %20 = sbr.rel (0) target = $region9
    $region8: #{tpu_custom_call.1} parent=1 // pred_region
      %22 = dma.done [#allocation3], 64
    $region9: #{tpu_custom_call.1} parent=1 // pred_fallthru
      _
    %v23 = vld [vmem:[#allocation2] sm:$0xf]
    %v24 = vmax.f32 %v23, 0.0
    %v25 = vand.u32 2147483647, %v23
    %v26 = vsub.f32 0.0, %v25
    %v27 = vmul.f32 %v26, 1.442695
    %v28 = vpow.pop %v27
    %v29 = vadd.f32 %v28, 1.0
    %v30 = vlog2.pop %v29
    %v31 = vmul.f32 %v30, 0.6931472
    %v32 = vmul.f32 -0.5, %v28
    %v33 = vadd.f32 %v32, 1.0
    %v34 = vmul.f32 %v33, %v28
    %v35 = vand.u32 2147483647, %v28
    %vm36 = vcmp.lt.f32.partialorder %v35, 0.0004427343
    %v37 = vsel %vm36, %v34, %v31
    %v38 = vadd.f32 %v24, %v37
    %v39 = vsub.f32 %v38, %v23
    %vm40 = vcmask 1043456
    %v41 = vsel %vm40, %v39, 0.0
    %v42 = vrot.slane %v41, 4
    %v43 = vadd.f32 %v41, %v42
    %v44 = vrot.slane %v43, 2
    %v45 = vadd.f32 %v43, %v44
    %v46 = vrot.slane %v45, 1
    %v47 = vadd.f32 %v45, %v46
    %v48 = vmul.f32 %v47, 0.0006510417
    %49 = vst [vmem:[#allocation5] sm:$0x1] %v48
    // Predicated region
    $region10: #{tpu_custom_call.1} parent=1 // pred_check
      _
    $region11: #{tpu_custom_call.1} parent=1 // pred_check_branch
      %51 = sbr.rel (0) target = $region13
    $region12: #{tpu_custom_call.1} parent=1 // pred_region
      %53 = vsyncadd [#allocation4], 0
      %s55 = sshll.u32 [#allocation5], 4
      %s56 = int_to_ptr.vmem [resolvable:$true] %s55
      %s57 = sshll.u32 %s1, 4
      %s58 = int_to_ptr.hbm [resolvable:$true] %s57
      %60 = dma.vmem_to_hbm [thread:$0]  %s56, 16, %s58, [#allocation4]
    $region13: #{tpu_custom_call.1} parent=1 // pred_fallthru
      _
    // Predicated region
    $region14: #{tpu_custom_call.1} parent=1 // pred_check
      _
    $region15: #{tpu_custom_call.1} parent=1 // pred_check_branch
      %62 = sbr.rel (0) target = $region17
    $region16: #{tpu_custom_call.1} parent=1 // pred_region
      %64 = dma.done [#allocation4], 16
    $region17: #{tpu_custom_call.1} parent=1 // pred_fallthru
      _
    %65 = vsyncpa [#allocation3], 1
    %66 = vsyncpa [#allocation4], 1

</llo_original>
